<compile_context>
chip_gen: v7x
topology: tpu7x:2x2x1
jax: 0.10.0
libtpu: 0.0.40
codegen_flags: <defaults>
</compile_context>

<pallas_src>
from functools import partial

import jax
import jax.numpy as jnp
import numpy as np
from jax.experimental import pallas as pl
from jax.experimental.pallas import tpu as pltpu


def gat_kernel(v_ref, e_ref, idx_ref, w_ref, ae_ref, b_ref, out_ref, *, F, M, Bg):
    # per-group blocks:
    #  v_ref   (1, Vg, D)         flattened node features for Bg batches (Vg = Bg*N)
    #  e_ref   (1, Eg, 128)       flattened edge features (Eg = Bg*M)
    #  idx_ref (1, 1, 2*Eg) int32 [sender ids | receiver ids], already offset per batch
    #  w_ref   (D, F+2)           [W^T | W^T a_s | W^T a_r]
    #  ae_ref  (1, 128)           attention weights for the E slice
    #  b_ref   (1, 1)             attention bias
    #  out_ref (1, Vg, OUT_W)     lane-dense (128-wide) padded output slab
    V = v_ref[0]                      # [Vg, D]
    Ef = e_ref[0]                     # [Eg, 128]
    idx_row = idx_ref[0]              # [1, 2*Eg] int32
    Vg = V.shape[0]
    Eg = Bg * M
    OUT_W = out_ref.shape[2]

    # project once per node; sender/receiver attention logits ride along as 2 columns
    H = jnp.dot(V, w_ref[...], preferred_element_type=jnp.float32)      # [Vg, F+2]

    # transposed block-diagonal one-hot: rows = nodes, cols = (sender edges | receiver edges)
    node_iota = jax.lax.broadcasted_iota(jnp.int32, (Vg, 2 * Eg), 0)     # [Vg, 2Eg]
    oh_t = (node_iota == idx_row).astype(jnp.float32)                    # [Vg, 2Eg]

    # one gather matmul yields h_sender, logit_sender (sender half) and logit_receiver
    # (receiver half) — no per-edge lane-1 matmuls.
    gall = jax.lax.dot_general(oh_t, H, (((0,), (0,)), ((), ())),
                               preferred_element_type=jnp.float32)       # [2Eg, F+2]
    h_s = gall[:Eg, :F]                                                  # [Eg, F]
    logit_s = gall[:Eg, F:F + 1]                                         # [Eg, 1]
    logit_r = gall[Eg:, F + 1:F + 2]                                     # [Eg, 1]

    # E @ a_e as a VPU multiply + lane reduce (avoids a lane-1 MXU output)
    logit_e = jnp.sum(Ef * ae_ref[...], axis=-1, keepdims=True)          # [Eg, 1]

    logits = logit_s + logit_r + logit_e + b_ref[...]                    # [Eg, 1]
    logits = jnp.where(logits > 0, logits, 0.2 * logits)                 # LeakyReLU(0.2)

    # exp(x - per-batch max): static unroll over the (few) batches in this block
    att_chunks = []
    for b in range(Bg):
        lb = logits[b * M:(b + 1) * M, :]
        att_chunks.append(jnp.exp(lb - jnp.max(lb)))
    att = att_chunks[0] if Bg == 1 else jnp.concatenate(att_chunks, axis=0)  # [Eg, 1]

    # fused scatter_sum over the sender index: one matmul produces [num | den]
    scat = jnp.concatenate([att * h_s, att], axis=1)                     # [Eg, F+1]
    r = jnp.dot(oh_t[:, :Eg], scat, preferred_element_type=jnp.float32)  # [Vg, F+1]

    den = r[:, F:F + 1]
    inv = pl.reciprocal(den + 1e-8, approx=False)   # approx=True is ~free on EUP, ~2^-12 rel err
    out_vals = r[:, :F] * inv                                            # [Vg, F]

    # lane-dense 128-wide store; wrapper slices back to F columns
    pad = jnp.zeros((Vg, OUT_W - F), jnp.float32)
    out_ref[0] = jnp.concatenate([out_vals, pad], axis=1)


def gat_forward(V, E, edges, W_edge, a_w, a_b, num_groups=1):
    """V: [B,N,D], E: [B,M,EF], edges: [B,M,2] int32,
    W_edge: [F,D] (torch Linear layout), a_w: [1, 2F+EF], a_b: [1].

    num_groups: number of (parallel) grid steps; 1 folds the whole batch into one
    step (best on v5e/v6e single-TC); 2 lets v7x's two TensorCores split the batch.
    """
    B, N, D = V.shape
    M, EF = E.shape[1], E.shape[2]
    F = W_edge.shape[0]
    assert B % num_groups == 0
    G = num_groups
    Bg = B // G
    Vg = Bg * N
    Eg = Bg * M
    OUT_W = ((F + 127) // 128) * 128   # lane-dense padded output width

    # parameters: fold the sender/receiver attention projections into the f_edge matmul
    W_t = jnp.asarray(W_edge.T, jnp.float32)                              # [D, F]
    a_s = jnp.asarray(a_w[0, :F], jnp.float32).reshape(F, 1)
    a_r = jnp.asarray(a_w[0, F:2 * F], jnp.float32).reshape(F, 1)
    a_e = jnp.asarray(a_w[0, 2 * F:], jnp.float32).reshape(1, EF)
    bias = jnp.asarray(a_b, jnp.float32).reshape(1, 1)
    hp = jax.lax.Precision.HIGHEST
    W_aug = jnp.concatenate(
        [W_t, jnp.dot(W_t, a_s, precision=hp), jnp.dot(W_t, a_r, precision=hp)],
        axis=1)                                                            # [D, F+2]

    # group & flatten the batch; offset node indices into the group-flat node space
    Vf = jnp.asarray(V, jnp.float32).reshape(G, Vg, D)
    Ef = jnp.asarray(E, jnp.float32).reshape(G, Eg, EF)
    local_off = ((jnp.arange(B) % Bg) * N).astype(jnp.int32)[:, None]      # [B, 1]
    s_idx = edges[..., 0].astype(jnp.int32) + local_off                    # [B, M]
    r_idx = edges[..., 1].astype(jnp.int32) + local_off                    # [B, M]
    idx = jnp.concatenate([s_idx.reshape(G, Eg), r_idx.reshape(G, Eg)], axis=1)
    idx = idx.reshape(G, 1, 2 * Eg)                                        # lane-major indices

    out_padded = pl.pallas_call(
        partial(gat_kernel, F=F, M=M, Bg=Bg),
        out_shape=jax.ShapeDtypeStruct((G, Vg, OUT_W), jnp.float32),
        grid_spec=pltpu.PrefetchScalarGridSpec(
            num_scalar_prefetch=0,
            grid=(G,),
            in_specs=[
                pl.BlockSpec((1, Vg, D), lambda g: (g, 0, 0)),
                pl.BlockSpec((1, Eg, EF), lambda g: (g, 0, 0)),
                pl.BlockSpec((1, 1, 2 * Eg), lambda g: (g, 0, 0)),
                pl.BlockSpec((D, F + 2), lambda g: (0, 0)),
                pl.BlockSpec((1, EF), lambda g: (0, 0)),
                pl.BlockSpec((1, 1), lambda g: (0, 0)),
            ],
            out_specs=pl.BlockSpec((1, Vg, OUT_W), lambda g: (g, 0, 0)),
        ),
        compiler_params=pltpu.CompilerParams(
            dimension_semantics=("parallel",)),
    )(Vf, Ef, idx, W_aug, a_e, bias)

    return out_padded[:, :, :F].reshape(B, N, F)


def gat_reference(V, E, edges, W_edge, a_w, a_b):
    """Pure-JAX reference mirroring the PyTorch forward."""
    B, N, D = V.shape
    F = W_edge.shape[0]
    batch_ix = jnp.arange(B)[:, None]
    senders = V[batch_ix, edges[..., 0], :]                       # [B, M, D]
    receivers = V[batch_ix, edges[..., 1], :]                     # [B, M, D]
    h_s = senders @ W_edge.T                                      # [B, M, F]
    h_r = receivers @ W_edge.T
    att_in = jnp.concatenate([h_s, h_r, E], axis=-1)              # [B, M, 2F+128]
    logits = att_in @ a_w.T + a_b                                 # [B, M, 1]
    att = jnp.where(logits > 0, logits, 0.2 * logits)
    att = jnp.exp(att - jnp.max(att, axis=1, keepdims=True))
    onehot = (edges[..., 0][..., None] == jnp.arange(N)).astype(jnp.float32)  # [B,M,N]
    num = jnp.einsum('bmn,bmf->bnf', onehot, att * h_s)
    den = jnp.einsum('bmn,bmf->bnf', onehot, att)
    return num / (den + 1e-8)


if __name__ == "__main__":
    B, N, M = 2, 16, 32          # batch, nodes, edges
    node_size, output_size = 16, 8
    E_FEAT = 128                 # fixed by the module (output_size*2 + 128)

    key = jax.random.PRNGKey(0)
    k_v, k_e, k_s, k_r, k_w, k_aw, k_ab = jax.random.split(key, 7)

    V = jax.random.normal(k_v, (B, N, node_size), dtype=jnp.float32)
    E = jax.random.normal(k_e, (B, M, E_FEAT), dtype=jnp.float32)
    send = jax.random.randint(k_s, (B, M, 1), 0, N, dtype=jnp.int32)
    recv = jax.random.randint(k_r, (B, M, 1), 0, N, dtype=jnp.int32)
    edges = jnp.concatenate([send, recv], axis=-1)                # [B, M, 2]

    # deterministic parameters (torch Linear layouts)
    W_edge = 0.1 * jax.random.normal(k_w, (output_size, node_size), jnp.float32)
    a_w = 0.1 * jax.random.normal(k_aw, (1, 2 * output_size + E_FEAT), jnp.float32)
    a_b = 0.1 * jax.random.normal(k_ab, (1,), jnp.float32)

    out = gat_forward(V, E, edges, W_edge, a_w, a_b)
    out = jax.block_until_ready(out)

    ref = gat_reference(V, E, edges, W_edge, a_w, a_b)
    np.testing.assert_allclose(np.asarray(out), np.asarray(ref),
                               rtol=5e-4, atol=1e-5)
    print("KERNEL_OK")
</pallas_src>

<mosaic_0001>
module attributes {stable_mosaic.version = 11 : i64} {
  func.func @gat_kernel(%arg0: i32, %arg1: memref<1x32x16xf32, #tpu.memory_space<vmem>>, %arg2: memref<1x64x128xf32, #tpu.memory_space<vmem>>, %arg3: memref<1x1x128xi32, #tpu.memory_space<vmem>>, %arg4: memref<16x10xf32, #tpu.memory_space<vmem>>, %arg5: memref<1x128xf32, #tpu.memory_space<vmem>>, %arg6: memref<1x1xf32, #tpu.memory_space<vmem>>, %arg7: memref<1x32x128xf32, #tpu.memory_space<vmem>>) attributes {dimension_semantics = [#tpu.dimension_semantics<parallel>], iteration_bounds = array<i64: 1>, scalar_prefetch = 0 : i64, scratch_operands = 0 : i64, tpu.core_type = #tpu.core_type<tc>, window_params = [{transform_indices = @transform_0, window_bounds = array<i64: 1, 32, 16>}, {transform_indices = @transform_1, window_bounds = array<i64: 1, 64, 128>}, {transform_indices = @transform_2, window_bounds = array<i64: 1, 1, 128>}, {pipeline_mode = #tpu.pipeline_mode<synchronous>, transform_indices = @transform_3, window_bounds = array<i64: 16, 10>}, {pipeline_mode = #tpu.pipeline_mode<synchronous>, transform_indices = @transform_4, window_bounds = array<i64: 1, 128>}, {pipeline_mode = #tpu.pipeline_mode<synchronous>, transform_indices = @transform_5, window_bounds = array<i64: 1, 1>}, {transform_indices = @transform_6, window_bounds = array<i64: 1, 32, 128>}]} {
    %c0 = arith.constant 0 : index
    %c0_0 = arith.constant 0 : index
    %c0_1 = arith.constant 0 : index
    %0 = vector.load %arg1[%c0, %c0_0, %c0_1] : memref<1x32x16xf32, #tpu.memory_space<vmem>>, vector<1x32x16xf32>
    %1 = vector.shape_cast %0 : vector<1x32x16xf32> to vector<32x16xf32>
    %c0_2 = arith.constant 0 : index
    %c0_3 = arith.constant 0 : index
    %c0_4 = arith.constant 0 : index
    %2 = vector.load %arg2[%c0_2, %c0_3, %c0_4] : memref<1x64x128xf32, #tpu.memory_space<vmem>>, vector<1x64x128xf32>
    %3 = vector.shape_cast %2 : vector<1x64x128xf32> to vector<64x128xf32>
    %c0_5 = arith.constant 0 : index
    %c0_6 = arith.constant 0 : index
    %c0_7 = arith.constant 0 : index
    %4 = vector.load %arg3[%c0_5, %c0_6, %c0_7] : memref<1x1x128xi32, #tpu.memory_space<vmem>>, vector<1x1x128xi32>
    %5 = vector.shape_cast %4 : vector<1x1x128xi32> to vector<1x128xi32>
    %c0_8 = arith.constant 0 : index
    %c0_9 = arith.constant 0 : index
    %6 = vector.load %arg4[%c0_8, %c0_9] : memref<16x10xf32, #tpu.memory_space<vmem>>, vector<16x10xf32>
    %cst = arith.constant dense<0.000000e+00> : vector<32x10xf32>
    %7 = tpu.matmul %1, %6, %cst {dimension_numbers = #tpu.dot_dimension_numbers<[1], [0], [0], [1], [0, 0, 1, 1], [], []>} : vector<32x16xf32>, vector<16x10xf32>, vector<32x10xf32> -> vector<32x10xf32>
    %8 = tpu.iota {dimensions = array<i32: 0>} : vector<32x128xi32>
    %9 = vector.broadcast %5 : vector<1x128xi32> to vector<32x128xi32>
    %10 = arith.cmpi eq, %8, %9 : vector<32x128xi32>
    %11 = arith.extui %10 : vector<32x128xi1> to vector<32x128xi32>
    %12 = arith.sitofp %11 : vector<32x128xi32> to vector<32x128xf32>
    %cst_10 = arith.constant dense<0.000000e+00> : vector<128x10xf32>
    %13 = tpu.matmul %12, %7, %cst_10 {dimension_numbers = #tpu.dot_dimension_numbers<[0], [0], [1], [1], [0, 1, 1, 1], [], []>} : vector<32x128xf32>, vector<32x10xf32>, vector<128x10xf32> -> vector<128x10xf32>
    %14 = vector.extract_strided_slice %13 {offsets = [0, 0], sizes = [64, 8], strides = [1, 1]} : vector<128x10xf32> to vector<64x8xf32>
    %15 = vector.extract_strided_slice %13 {offsets = [0, 8], sizes = [64, 1], strides = [1, 1]} : vector<128x10xf32> to vector<64x1xf32>
    %16 = vector.extract_strided_slice %13 {offsets = [64, 9], sizes = [64, 1], strides = [1, 1]} : vector<128x10xf32> to vector<64x1xf32>
    %c0_11 = arith.constant 0 : index
    %c0_12 = arith.constant 0 : index
    %17 = vector.load %arg5[%c0_11, %c0_12] : memref<1x128xf32, #tpu.memory_space<vmem>>, vector<1x128xf32>
    %18 = vector.broadcast %17 : vector<1x128xf32> to vector<64x128xf32>
    %19 = arith.mulf %3, %18 : vector<64x128xf32>
    %cst_13 = arith.constant dense<0.000000e+00> : vector<64xf32>
    %20 = vector.multi_reduction <add>, %19, %cst_13 [1] : vector<64x128xf32> to vector<64xf32>
    %21 = vector.shape_cast %20 : vector<64xf32> to vector<64x1xf32>
    %22 = arith.addf %15, %16 : vector<64x1xf32>
    %23 = arith.addf %22, %21 : vector<64x1xf32>
    %c0_14 = arith.constant 0 : index
    %c0_15 = arith.constant 0 : index
    %24 = vector.load %arg6[%c0_14, %c0_15] : memref<1x1xf32, #tpu.memory_space<vmem>>, vector<1x1xf32>
    %25 = vector.broadcast %24 : vector<1x1xf32> to vector<64x1xf32>
    %26 = arith.addf %23, %25 : vector<64x1xf32>
    %cst_16 = arith.constant 0.000000e+00 : f32
    %27 = vector.broadcast %cst_16 : f32 to vector<64x1xf32>
    %28 = arith.cmpf ogt, %26, %27 : vector<64x1xf32>
    %cst_17 = arith.constant 2.000000e-01 : f32
    %29 = vector.broadcast %cst_17 : f32 to vector<64x1xf32>
    %30 = arith.mulf %29, %26 : vector<64x1xf32>
    %31 = arith.select %28, %26, %30 : vector<64x1xi1>, vector<64x1xf32>
    %32 = vector.extract_strided_slice %31 {offsets = [0, 0], sizes = [32, 1], strides = [1, 1]} : vector<64x1xf32> to vector<32x1xf32>
    %33 = vector.shape_cast %32 : vector<32x1xf32> to vector<1x32x1xf32>
    %cst_18 = arith.constant dense<0xFF800000> : vector<1xf32>
    %34 = vector.multi_reduction <maximumf>, %33, %cst_18 [1, 2] : vector<1x32x1xf32> to vector<1xf32>
    %35 = vector.shape_cast %34 : vector<1xf32> to vector<1x1x1xf32>
    %36 = vector.extract %35[0, 0, 0] : f32 from vector<1x1x1xf32>
    %37 = vector.broadcast %36 : f32 to vector<32x1xf32>
    %38 = arith.subf %32, %37 : vector<32x1xf32>
    %39 = math.exp %38 : vector<32x1xf32>
    %40 = vector.extract_strided_slice %31 {offsets = [32, 0], sizes = [32, 1], strides = [1, 1]} : vector<64x1xf32> to vector<32x1xf32>
    %41 = vector.shape_cast %40 : vector<32x1xf32> to vector<1x32x1xf32>
    %cst_19 = arith.constant dense<0xFF800000> : vector<1xf32>
    %42 = vector.multi_reduction <maximumf>, %41, %cst_19 [1, 2] : vector<1x32x1xf32> to vector<1xf32>
    %43 = vector.shape_cast %42 : vector<1xf32> to vector<1x1x1xf32>
    %44 = vector.extract %43[0, 0, 0] : f32 from vector<1x1x1xf32>
    %45 = vector.broadcast %44 : f32 to vector<32x1xf32>
    %46 = arith.subf %40, %45 : vector<32x1xf32>
    %47 = math.exp %46 : vector<32x1xf32>
    %48 = tpu.concatenate %39, %47 in 0 : vector<32x1xf32>, vector<32x1xf32> -> vector<64x1xf32>
    %49 = vector.broadcast %48 : vector<64x1xf32> to vector<64x8xf32>
    %50 = arith.mulf %49, %14 : vector<64x8xf32>
    %51 = tpu.concatenate %50, %48 in 1 : vector<64x8xf32>, vector<64x1xf32> -> vector<64x9xf32>
    %52 = vector.extract_strided_slice %12 {offsets = [0, 0], sizes = [32, 64], strides = [1, 1]} : vector<32x128xf32> to vector<32x64xf32>
    %cst_20 = arith.constant dense<0.000000e+00> : vector<32x9xf32>
    %53 = tpu.matmul %52, %51, %cst_20 {dimension_numbers = #tpu.dot_dimension_numbers<[1], [0], [0], [1], [0, 0, 1, 1], [], []>} : vector<32x64xf32>, vector<64x9xf32>, vector<32x9xf32> -> vector<32x9xf32>
    %54 = vector.extract_strided_slice %53 {offsets = [0, 8], sizes = [32, 1], strides = [1, 1]} : vector<32x9xf32> to vector<32x1xf32>
    %cst_21 = arith.constant 9.99999993E-9 : f32
    %55 = vector.broadcast %cst_21 : f32 to vector<32x1xf32>
    %56 = arith.addf %54, %55 : vector<32x1xf32>
    %57 = tpu.reciprocal %56 : vector<32x1xf32> -> vector<32x1xf32>
    %58 = vector.extract_strided_slice %53 {offsets = [0, 0], sizes = [32, 8], strides = [1, 1]} : vector<32x9xf32> to vector<32x8xf32>
    %59 = vector.broadcast %57 : vector<32x1xf32> to vector<32x8xf32>
    %60 = arith.mulf %58, %59 : vector<32x8xf32>
    %cst_22 = arith.constant 0.000000e+00 : f32
    %61 = vector.broadcast %cst_22 : f32 to vector<32x120xf32>
    %62 = tpu.concatenate %60, %61 in 1 : vector<32x8xf32>, vector<32x120xf32> -> vector<32x128xf32>
    %c0_23 = arith.constant 0 : index
    %c0_24 = arith.constant 0 : index
    %c0_25 = arith.constant 0 : index
    %63 = vector.load %arg7[%c0_23, %c0_24, %c0_25] : memref<1x32x128xf32, #tpu.memory_space<vmem>>, vector<1x32x128xf32>
    %64 = vector.shape_cast %63 : vector<1x32x128xf32> to vector<32x128xf32>
    %65 = vector.shape_cast %62 : vector<32x128xf32> to vector<1x32x128xf32>
    tpu.vector_store %arg7[%c0_23, %c0_24, %c0_25], %65 {strides = array<i32>} : memref<1x32x128xf32, #tpu.memory_space<vmem>>, vector<1x32x128xf32>,
    return
  }
  func.func @transform_0(%arg0: i32) -> (i32, i32, i32) {
    %c0_i32 = arith.constant 0 : i32
    %c0_i32_0 = arith.constant 0 : i32
    %c0_i32_1 = arith.constant 0 : i32
    return %arg0, %c0_i32, %c0_i32_0 : i32, i32, i32
  }
  func.func @transform_1(%arg0: i32) -> (i32, i32, i32) {
    %c0_i32 = arith.constant 0 : i32
    %c0_i32_0 = arith.constant 0 : i32
    %c0_i32_1 = arith.constant 0 : i32
    return %arg0, %c0_i32, %c0_i32_0 : i32, i32, i32
  }
  func.func @transform_2(%arg0: i32) -> (i32, i32, i32) {
    %c0_i32 = arith.constant 0 : i32
    %c0_i32_0 = arith.constant 0 : i32
    %c0_i32_1 = arith.constant 0 : i32
    return %arg0, %c0_i32, %c0_i32_0 : i32, i32, i32
  }
  func.func @transform_3(%arg0: i32) -> (i32, i32) {
    %c0_i32 = arith.constant 0 : i32
    %c0_i32_0 = arith.constant 0 : i32
    %c0_i32_1 = arith.constant 0 : i32
    return %c0_i32, %c0_i32_0 : i32, i32
  }
  func.func @transform_4(%arg0: i32) -> (i32, i32) {
    %c0_i32 = arith.constant 0 : i32
    %c0_i32_0 = arith.constant 0 : i32
    %c0_i32_1 = arith.constant 0 : i32
    return %c0_i32, %c0_i32_0 : i32, i32
  }
  func.func @transform_5(%arg0: i32) -> (i32, i32) {
    %c0_i32 = arith.constant 0 : i32
    %c0_i32_0 = arith.constant 0 : i32
    %c0_i32_1 = arith.constant 0 : i32
    return %c0_i32, %c0_i32_0 : i32, i32
  }
  func.func @transform_6(%arg0: i32) -> (i32, i32, i32) {
    %c0_i32 = arith.constant 0 : i32
    %c0_i32_0 = arith.constant 0 : i32
    %c0_i32_1 = arith.constant 0 : i32
    return %arg0, %c0_i32, %c0_i32_0 : i32, i32, i32
  }
}

</mosaic_0001>

<llo_original>
// kernel: tpu_custom_call.1
$region0: #{tpu_custom_call.1}
  #allocation0 [shape = 'u32[]', space=smem, size = 0x4, offset = 0x4, fixed_abs, tag = 'smem constant byte address 0x4 - core index']
  #allocation1 [shape = 'u32[144,128]{1,0:T(1,128)}', space=vmem, size = 0x12000, scoped, tag = 'internal scratch']
  #allocation2 [shape = 'f32[1,1]{1,0:T(1,128)S(1)}', space=vmem, size = 0x200, scoped, tag = 'scoped memory for tpu_custom_call.1']
  %s0 = inlined_call_operand.vmem [shape: f32[1,32,16], index: 0, kind: input, shape index: {}]
  %s1 = inlined_call_operand.hbm [shape: f32[1,64,128], index: 1, kind: input, shape index: {}]
  %s2 = inlined_call_operand.vmem [shape: s32[1,1,128], index: 2, kind: input, shape index: {}]
  %s3 = inlined_call_operand.vmem [shape: f32[16,10], index: 3, kind: input, shape index: {}]
  %s4 = inlined_call_operand.vmem [shape: f32[1,128], index: 4, kind: input, shape index: {}]
  %s5 = inlined_call_operand.<no memory space> [shape: f32[1,1], index: 5, kind: input, shape index: {}]
  %s6 = inlined_call_operand.hbm [shape: f32[1,32,128], index: 6, kind: output, shape index: {}]
  %s7 = sld [smem:[#allocation0]]
  $region38: #{tpu_custom_call.1} parent=0
    _
  %s9 = ssub.s32 1, %s7
  %s10 = scalar_select 0, %s9, %s7
  %v11 = vstv %s5
  %12 = vst [vmem:[#allocation2] sm:$0x1] %v11
  $region1: #{tpu_custom_call.1} parent=0
    #allocation3 [shape = 'u8[32768]{0}', space=vmem, size = 0x8000, scoped, tag = 'input window, operand 1, single buffered']
    #allocation4 [shape = 's32[1]{0}', space=sflag, size = 0x4, scoped, tag = 'scoped memory for tpu_custom_call.1']
    #allocation5 [shape = 's32[1]{0}', space=sflag, size = 0x4, scoped, tag = 'scoped memory for tpu_custom_call.1']
    #allocation6 [shape = 'u8[16384]{0}', space=vmem, size = 0x4000, scoped, tag = 'output window, operand 0, single buffered']
    %13 = vsyncpa [#allocation4], 0
    %14 = vsyncpa [#allocation5], 0
    // Predicated region
    $region2: #{tpu_custom_call.1} parent=1 // pred_check
      _
    $region3: #{tpu_custom_call.1} parent=1 // pred_check_branch
      %16 = sbr.rel (0) target = $region5
    $region4: #{tpu_custom_call.1} parent=1 // pred_region
      _
    $region5: #{tpu_custom_call.1} parent=1 // pred_fallthru
      _
    // Predicated region
    $region6: #{tpu_custom_call.1} parent=1 // pred_check
      _
    $region7: #{tpu_custom_call.1} parent=1 // pred_check_branch
      %18 = sbr.rel (0) target = $region9
    $region8: #{tpu_custom_call.1} parent=1 // pred_region
      %s20 = ssub.s32 1024, 1024
      %21 = vsyncadd [#allocation4], %s20
      %s22 = sshll.u32 [#allocation3], 4
      %s23 = int_to_ptr.vmem [resolvable:$true] %s22
      %28 = dma.hbm_to_vmem [thread:$0]  %s1, 1024, %s23, [#allocation4], 128, 128, 8
    $region9: #{tpu_custom_call.1} parent=1 // pred_fallthru
      _
    // Predicated region
    $region10: #{tpu_custom_call.1} parent=1 // pred_check
      _
    $region11: #{tpu_custom_call.1} parent=1 // pred_check_branch
      %30 = sbr.rel (0) target = $region13
    $region12: #{tpu_custom_call.1} parent=1 // pred_region
      _
    $region13: #{tpu_custom_call.1} parent=1 // pred_fallthru
      _
    // Predicated region
    $region14: #{tpu_custom_call.1} parent=1 // pred_check
      _
    $region15: #{tpu_custom_call.1} parent=1 // pred_check_branch
      %32 = sbr.rel (0) target = $region17
    $region16: #{tpu_custom_call.1} parent=1 // pred_region
      _
    $region17: #{tpu_custom_call.1} parent=1 // pred_fallthru
      _
    // Predicated region
    $region18: #{tpu_custom_call.1} parent=1 // pred_check
      _
    $region19: #{tpu_custom_call.1} parent=1 // pred_check_branch
      %34 = sbr.rel (0) target = $region21
    $region20: #{tpu_custom_call.1} parent=1 // pred_region
      _
    $region21: #{tpu_custom_call.1} parent=1 // pred_fallthru
      _
    // Predicated region
    $region22: #{tpu_custom_call.1} parent=1 // pred_check
      _
    $region23: #{tpu_custom_call.1} parent=1 // pred_check_branch
      %36 = sbr.rel (0) target = $region25
    $region24: #{tpu_custom_call.1} parent=1 // pred_region
      _
    $region25: #{tpu_custom_call.1} parent=1 // pred_fallthru
      _
    // Predicated region
    $region26: #{tpu_custom_call.1} parent=1 // pred_check
      _
    $region27: #{tpu_custom_call.1} parent=1 // pred_check_branch
      %38 = sbr.rel (0) target = $region29
    $region28: #{tpu_custom_call.1} parent=1 // pred_region
      %39 = dma.done [#allocation4], 1024
    $region29: #{tpu_custom_call.1} parent=1 // pred_fallthru
      _
    %v40 = vld [vmem:[%s0] sm:$0xff]
    %v41 = vld [vmem:[%s0 + $0x8] sm:$0xff]
    %v42 = vld [vmem:[%s0 + $0x10] sm:$0xff]
    %v43 = vld [vmem:[%s0 + $0x18] sm:$0xff]
    %v44 = vld [vmem:[#allocation3] sm:$0xff]
    %v45 = vld [vmem:[#allocation3 + $0x8] sm:$0xff]
    %v46 = vld [vmem:[#allocation3 + $0x10] sm:$0xff]
    %v47 = vld [vmem:[#allocation3 + $0x18] sm:$0xff]
    %v48 = vld [vmem:[#allocation3 + $0x20] sm:$0xff]
    %v49 = vld [vmem:[#allocation3 + $0x28] sm:$0xff]
    %v50 = vld [vmem:[#allocation3 + $0x30] sm:$0xff]
    %v51 = vld [vmem:[#allocation3 + $0x38] sm:$0xff]
    %v52 = vld [vmem:[%s2] sm:$0x1]
    %v53 = vld [vmem:[%s3] sm:$0xff]
    %v54 = vld [vmem:[%s3 + $0x8] sm:$0xff]
    %vm55 = vcmask 130048
    %v57 = vsel %vm55, %v40, 0
    %v60 = vsel %vm55, %v41, 0
    %v63 = vsel %vm55, %v42, 0
    %v66 = vsel %vm55, %v43, 0
    %68 = vmatprep.subr.mxu0 0.0
    %69 = vmatpush1.msra.mxu0 %v53
    %70 = vmatprep.subr.mxu0 0.0
    %71 = vmatpush1.msra.mxu0 %v54
    %72 = vmatprep.subr.mxu0 0.0
    %73 = vmatpush1.msra.mxu0 0.0
    %74 = vmatprep.subr.mxu0 0.0
    %75 = vmatpush1.msra.mxu0 0.0
    %76 = vmatprep.subr.mxu0 0.0
    %77 = vmatpush1.msra.mxu0 0.0
    %78 = vmatprep.subr.mxu0 0.0
    %79 = vmatpush1.msra.mxu0 0.0
    %80 = vmatprep.subr.mxu0 0.0
    %81 = vmatpush1.msra.mxu0 0.0
    %82 = vmatprep.subr.mxu0 0.0
    %83 = vmatpush1.msra.mxu0 0.0
    %84 = vmatprep.subr.mxu0 0.0
    %85 = vmatpush1.msra.mxu0 0.0
    %86 = vmatprep.subr.mxu0 0.0
    %87 = vmatpush1.msra.mxu0 0.0
    %88 = vmatprep.subr.mxu0 0.0
    %89 = vmatpush1.msra.mxu0 0.0
    %90 = vmatprep.subr.mxu0 0.0
    %91 = vmatpush1.msra.mxu0 0.0
    %92 = vmatprep.subr.mxu0 0.0
    %93 = vmatpush1.msra.mxu0 0.0
    %94 = vmatprep.subr.mxu0 0.0
    %95 = vmatpush1.msra.mxu0 0.0
    %96 = vmatprep.subr.mxu0 0.0
    %97 = vmatpush1.msra.mxu0 0.0
    %98 = vmatprep.subr.mxu0 0.0
    %99 = vmatpush1.msra.mxu0 0.0
    %100 = vmatprep.subr.mxu0 0.0
    %101 = vmatpush1.msra.mxu0 0.0
    %102 = vmatprep.subr.mxu0 0.0
    %103 = vmatpush1.msra.mxu0 0.0
    %104 = vmatprep.subr.mxu0 0.0
    %105 = vmatpush1.msra.mxu0 0.0
    %106 = vmatprep.subr.mxu0 0.0
    %107 = vmatpush1.msra.mxu0 0.0
    %108 = vmatprep.subr.mxu0 0.0
    %109 = vmatpush1.msra.mxu0 0.0
    %110 = vmatprep.subr.mxu0 0.0
    %111 = vmatpush1.msra.mxu0 0.0
    %112 = vmatprep.subr.mxu0 0.0
    %113 = vmatpush1.msra.mxu0 0.0
    %114 = vmatprep.subr.mxu0 0.0
    %115 = vmatpush1.msra.mxu0 0.0
    %116 = vmatprep.subr.mxu0 0.0
    %117 = vmatpush1.msra.mxu0 0.0
    %118 = vmatprep.subr.mxu0 0.0
    %119 = vmatpush1.msra.mxu0 0.0
    %120 = vmatprep.subr.mxu0 0.0
    %121 = vmatpush1.msra.mxu0 0.0
    %122 = vmatprep.subr.mxu0 0.0
    %123 = vmatpush1.msra.mxu0 0.0
    %124 = vmatprep.subr.mxu0 0.0
    %125 = vmatpush1.msra.mxu0 0.0
    %126 = vmatprep.subr.mxu0 0.0
    %127 = vmatpush1.msra.mxu0 0.0
    %128 = vmatprep.subr.mxu0 0.0
    %129 = vmatpush1.msra.mxu0 0.0
    %130 = vmatprep.subr.mxu0 0.0
    %131 = vmatpush1.msra.mxu0 0.0
    %132 = vmatprep.mubr.f32.mxu0 0.0
    %133 = vmatmul.mubr.f32.gmra.mrb[0].mxu0 %v57
    %v134 = vpop.f32.mrb[0].mxu0
    %v135 = vadd.f32 0.0, %v134
    %v136 = vpop.f32.mrb[0].mxu0
    %137 = vmatprep.mubr.f32.mxu0 0.0
    %138 = vmatmul.mubr.f32.gmra.mrb[0].mxu0 %v60
    %v139 = vpop.f32.mrb[0].mxu0
    %v140 = vadd.f32 0.0, %v139
    %v141 = vpop.f32.mrb[0].mxu0
    %142 = vmatprep.mubr.f32.mxu0 0.0
    %143 = vmatmul.mubr.f32.gmra.mrb[0].mxu0 %v63
    %v144 = vpop.f32.mrb[0].mxu0
    %v145 = vadd.f32 0.0, %v144
    %v146 = vpop.f32.mrb[0].mxu0
    %147 = vmatprep.mubr.f32.mxu0 0.0
    %148 = vmatmul.mubr.f32.gmra.mrb[0].mxu0 %v66
    %v149 = vpop.f32.mrb[0].mxu0
    %v150 = vadd.f32 0.0, %v149
    %v151 = vpop.f32.mrb[0].mxu0
    %152 = vdwg.mxu0
    %v153 = vlaneseq
    %v154 = vshrl.u32 %v153, 7
    %v155 = vadd.s32 %v154, 8
    %v156 = vadd.s32 %v154, 16
    %v157 = vadd.s32 %v154, 24
    %v158 = vlaneseq
    %v159 = vshrl.u32 %v158, 7
    %v160 = vsub.s32 0, %v159
    %v161 = vrot.slane %v52, %v160
    %vm162 = vcmp.eq.s32.totalorder %v154, %v161
    %vm163 = vcmp.eq.s32.totalorder %v155, %v161
    %vm164 = vcmp.eq.s32.totalorder %v156, %v161
    %vm165 = vcmp.eq.s32.totalorder %v157, %v161
    %v166 = vsel %vm162, 1, 0
    %v167 = vsel %vm163, 1, 0
    %v168 = vsel %vm164, 1, 0
    %v169 = vsel %vm165, 1, 0
    %v170 = vcvt.s32.f32 %v166
    %v171 = vcvt.s32.f32 %v167
    %v172 = vcvt.s32.f32 %v168
    %v173 = vcvt.s32.f32 %v169
    %174 = vxpose.xlu0.b32.start [1/16] %v170, 128
    %175 = vxpose.xlu0.b32.cont [2/16] %v171, 128
    %176 = vxpose.xlu0.b32.cont [3/16] %v172, 128
    %177 = vxpose.xlu0.b32.cont [4/16] %v173, 128
    %178 = vxpose.xlu0.b32.cont [5/16] 0.0, 128
    %179 = vxpose.xlu0.b32.cont [6/16] 0.0, 128
    %180 = vxpose.xlu0.b32.cont [7/16] 0.0, 128
    %181 = vxpose.xlu0.b32.cont [8/16] 0.0, 128
    %182 = vxpose.xlu0.b32.cont [9/16] 0.0, 128
    %183 = vxpose.xlu0.b32.cont [10/16] 0.0, 128
    %184 = vxpose.xlu0.b32.cont [11/16] 0.0, 128
    %185 = vxpose.xlu0.b32.cont [12/16] 0.0, 128
    %186 = vxpose.xlu0.b32.cont [13/16] 0.0, 128
    %187 = vxpose.xlu0.b32.cont [14/16] 0.0, 128
    %188 = vxpose.xlu0.b32.cont [15/16] 0.0, 128
    %189 = vxpose.xlu0.b32.end [16/16] 0.0, 128
    %v190 = vpop.trf.xlu0
    %v191 = vpop.trf.xlu0
    %v192 = vpop.trf.xlu0
    %v193 = vpop.trf.xlu0
    %v194 = vpop.trf.xlu0
    %v195 = vpop.trf.xlu0
    %v196 = vpop.trf.xlu0
    %v197 = vpop.trf.xlu0
    %v198 = vpop.trf.xlu0
    %v199 = vpop.trf.xlu0
    %v200 = vpop.trf.xlu0
    %v201 = vpop.trf.xlu0
    %v202 = vpop.trf.xlu0
    %v203 = vpop.trf.xlu0
    %v204 = vpop.trf.xlu0
    %v205 = vpop.trf.xlu0
    %vm206 = vcmask 261120
    %v208 = vsel %vm206, %v190, 0
    %v211 = vsel %vm206, %v191, 0
    %v214 = vsel %vm206, %v192, 0
    %v217 = vsel %vm206, %v193, 0
    %v220 = vsel %vm206, %v194, 0
    %v223 = vsel %vm206, %v195, 0
    %v226 = vsel %vm206, %v196, 0
    %v229 = vsel %vm206, %v197, 0
    %v232 = vsel %vm206, %v198, 0
    %v235 = vsel %vm206, %v199, 0
    %v238 = vsel %vm206, %v200, 0
    %v241 = vsel %vm206, %v201, 0
    %v244 = vsel %vm206, %v202, 0
    %v247 = vsel %vm206, %v203, 0
    %v250 = vsel %vm206, %v204, 0
    %v253 = vsel %vm206, %v205, 0
    %255 = vmatprep.subr.mxu0 0.0
    %256 = vmatpush1.msra.mxu0 %v135
    %257 = vmatprep.subr.mxu0 0.0
    %258 = vmatpush1.msra.mxu0 %v140
    %259 = vmatprep.subr.mxu0 0.0
    %260 = vmatpush1.msra.mxu0 %v145
    %261 = vmatprep.subr.mxu0 0.0
    %262 = vmatpush1.msra.mxu0 %v150
    %263 = vmatprep.subr.mxu0 0.0
    %264 = vmatpush1.msra.mxu0 0.0
    %265 = vmatprep.subr.mxu0 0.0
    %266 = vmatpush1.msra.mxu0 0.0
    %267 = vmatprep.subr.mxu0 0.0
    %268 = vmatpush1.msra.mxu0 0.0
    %269 = vmatprep.subr.mxu0 0.0
    %270 = vmatpush1.msra.mxu0 0.0
    %271 = vmatprep.subr.mxu0 0.0
    %272 = vmatpush1.msra.mxu0 0.0
    %273 = vmatprep.subr.mxu0 0.0
    %274 = vmatpush1.msra.mxu0 0.0
    %275 = vmatprep.subr.mxu0 0.0
    %276 = vmatpush1.msra.mxu0 0.0
    %277 = vmatprep.subr.mxu0 0.0
    %278 = vmatpush1.msra.mxu0 0.0
    %279 = vmatprep.subr.mxu0 0.0
    %280 = vmatpush1.msra.mxu0 0.0
    %281 = vmatprep.subr.mxu0 0.0
    %282 = vmatpush1.msra.mxu0 0.0
    %283 = vmatprep.subr.mxu0 0.0
    %284 = vmatpush1.msra.mxu0 0.0
    %285 = vmatprep.subr.mxu0 0.0
    %286 = vmatpush1.msra.mxu0 0.0
    %287 = vmatprep.subr.mxu0 0.0
    %288 = vmatpush1.msra.mxu0 0.0
    %289 = vmatprep.subr.mxu0 0.0
    %290 = vmatpush1.msra.mxu0 0.0
    %291 = vmatprep.subr.mxu0 0.0
    %292 = vmatpush1.msra.mxu0 0.0
    %293 = vmatprep.subr.mxu0 0.0
    %294 = vmatpush1.msra.mxu0 0.0
    %295 = vmatprep.subr.mxu0 0.0
    %296 = vmatpush1.msra.mxu0 0.0
    %297 = vmatprep.subr.mxu0 0.0
    %298 = vmatpush1.msra.mxu0 0.0
    %299 = vmatprep.subr.mxu0 0.0
    %300 = vmatpush1.msra.mxu0 0.0
    %301 = vmatprep.subr.mxu0 0.0
    %302 = vmatpush1.msra.mxu0 0.0
    %303 = vmatprep.subr.mxu0 0.0
    %304 = vmatpush1.msra.mxu0 0.0
    %305 = vmatprep.subr.mxu0 0.0
    %306 = vmatpush1.msra.mxu0 0.0
    %307 = vmatprep.subr.mxu0 0.0
    %308 = vmatpush1.msra.mxu0 0.0
    %309 = vmatprep.subr.mxu0 0.0
    %310 = vmatpush1.msra.mxu0 0.0
    %311 = vmatprep.subr.mxu0 0.0
    %312 = vmatpush1.msra.mxu0 0.0
    %313 = vmatprep.subr.mxu0 0.0
    %314 = vmatpush1.msra.mxu0 0.0
    %315 = vmatprep.subr.mxu0 0.0
    %316 = vmatpush1.msra.mxu0 0.0
    %317 = vmatprep.subr.mxu0 0.0
    %318 = vmatpush1.msra.mxu0 0.0
    %319 = vmatprep.mubr.f32.mxu0 0.0
    %320 = vmatmul.mubr.f32.gmra.mrb[0].mxu0 %v208
    %v321 = vpop.f32.mrb[0].mxu0
    %v322 = vadd.f32 0.0, %v321
    %v323 = vpop.f32.mrb[0].mxu0
    %324 = vmatprep.mubr.f32.mxu0 0.0
    %325 = vmatmul.mubr.f32.gmra.mrb[0].mxu0 %v211
    %v326 = vpop.f32.mrb[0].mxu0
    %v327 = vadd.f32 0.0, %v326
    %v328 = vpop.f32.mrb[0].mxu0
    %329 = vmatprep.mubr.f32.mxu0 0.0
    %330 = vmatmul.mubr.f32.gmra.mrb[0].mxu0 %v214
    %v331 = vpop.f32.mrb[0].mxu0
    %v332 = vadd.f32 0.0, %v331
    %v333 = vpop.f32.mrb[0].mxu0
    %334 = vmatprep.mubr.f32.mxu0 0.0
    %335 = vmatmul.mubr.f32.gmra.mrb[0].mxu0 %v217
    %v336 = vpop.f32.mrb[0].mxu0
    %v337 = vadd.f32 0.0, %v336
    %v338 = vpop.f32.mrb[0].mxu0
    %339 = vmatprep.mubr.f32.mxu0 0.0
    %340 = vmatmul.mubr.f32.gmra.mrb[0].mxu0 %v220
    %v341 = vpop.f32.mrb[0].mxu0
    %v342 = vadd.f32 0.0, %v341
    %v343 = vpop.f32.mrb[0].mxu0
    %344 = vmatprep.mubr.f32.mxu0 0.0
    %345 = vmatmul.mubr.f32.gmra.mrb[0].mxu0 %v223
    %v346 = vpop.f32.mrb[0].mxu0
    %v347 = vadd.f32 0.0, %v346
    %v348 = vpop.f32.mrb[0].mxu0
    %349 = vmatprep.mubr.f32.mxu0 0.0
    %350 = vmatmul.mubr.f32.gmra.mrb[0].mxu0 %v226
    %v351 = vpop.f32.mrb[0].mxu0
    %v352 = vadd.f32 0.0, %v351
    %v353 = vpop.f32.mrb[0].mxu0
    %354 = vmatprep.mubr.f32.mxu0 0.0
    %355 = vmatmul.mubr.f32.gmra.mrb[0].mxu0 %v229
    %v356 = vpop.f32.mrb[0].mxu0
    %v357 = vadd.f32 0.0, %v356
    %v358 = vpop.f32.mrb[0].mxu0
    %359 = vmatprep.mubr.f32.mxu0 0.0
    %360 = vmatmul.mubr.f32.gmra.mrb[0].mxu0 %v232
    %v361 = vpop.f32.mrb[0].mxu0
    %v362 = vadd.f32 0.0, %v361
    %v363 = vpop.f32.mrb[0].mxu0
    %364 = vmatprep.mubr.f32.mxu0 0.0
    %365 = vmatmul.mubr.f32.gmra.mrb[0].mxu0 %v235
    %v366 = vpop.f32.mrb[0].mxu0
    %v367 = vadd.f32 0.0, %v366
    %v368 = vpop.f32.mrb[0].mxu0
    %369 = vmatprep.mubr.f32.mxu0 0.0
    %370 = vmatmul.mubr.f32.gmra.mrb[0].mxu0 %v238
    %v371 = vpop.f32.mrb[0].mxu0
    %v372 = vadd.f32 0.0, %v371
    %v373 = vpop.f32.mrb[0].mxu0
    %374 = vmatprep.mubr.f32.mxu0 0.0
    %375 = vmatmul.mubr.f32.gmra.mrb[0].mxu0 %v241
    %v376 = vpop.f32.mrb[0].mxu0
    %v377 = vadd.f32 0.0, %v376
    %v378 = vpop.f32.mrb[0].mxu0
    %379 = vmatprep.mubr.f32.mxu0 0.0
    %380 = vmatmul.mubr.f32.gmra.mrb[0].mxu0 %v244
    %v381 = vpop.f32.mrb[0].mxu0
    %v382 = vadd.f32 0.0, %v381
    %v383 = vpop.f32.mrb[0].mxu0
    %384 = vmatprep.mubr.f32.mxu0 0.0
    %385 = vmatmul.mubr.f32.gmra.mrb[0].mxu0 %v247
    %v386 = vpop.f32.mrb[0].mxu0
    %v387 = vadd.f32 0.0, %v386
    %v388 = vpop.f32.mrb[0].mxu0
    %389 = vmatprep.mubr.f32.mxu0 0.0
    %390 = vmatmul.mubr.f32.gmra.mrb[0].mxu0 %v250
    %v391 = vpop.f32.mrb[0].mxu0
    %v392 = vadd.f32 0.0, %v391
    %v393 = vpop.f32.mrb[0].mxu0
    %394 = vmatprep.mubr.f32.mxu0 0.0
    %395 = vmatmul.mubr.f32.gmra.mrb[0].mxu0 %v253
    %v396 = vpop.f32.mrb[0].mxu0
    %v397 = vadd.f32 0.0, %v396
    %v398 = vpop.f32.mrb[0].mxu0
    %399 = vdwg.mxu0
    %v400 = vld [vmem:[%s4] sm:$0x1]
    %v402 = vlaneseq
    %v403 = vshrl.u32 %v402, 7
    %v404 = vsub.s32 0, %v403
    %v405 = vrot.slane %v400, %v404
    %v407 = vmul.f32 %v44, %v405
    %v408 = vmul.f32 %v45, %v405
    %v409 = vmul.f32 %v46, %v405
    %v410 = vmul.f32 %v47, %v405
    %v411 = vmul.f32 %v48, %v405
    %v412 = vmul.f32 %v49, %v405
    %v413 = vmul.f32 %v50, %v405
    %v414 = vmul.f32 %v51, %v405
    %415 = vadd.xlane.f32.xlu0 %v407
    %v416 = vpop.xlane.xlu0 %415
    %417 = vadd.xlane.f32.xlu0 %v408
    %v418 = vpop.xlane.xlu0 %417
    %419 = vadd.xlane.f32.xlu0 %v409
    %v420 = vpop.xlane.xlu0 %419
    %421 = vadd.xlane.f32.xlu0 %v410
    %v422 = vpop.xlane.xlu0 %421
    %423 = vadd.xlane.f32.xlu0 %v411
    %v424 = vpop.xlane.xlu0 %423
    %425 = vadd.xlane.f32.xlu0 %v412
    %v426 = vpop.xlane.xlu0 %425
    %427 = vadd.xlane.f32.xlu0 %v413
    %v428 = vpop.xlane.xlu0 %427
    %429 = vadd.xlane.f32.xlu0 %v414
    %v430 = vpop.xlane.xlu0 %429
    %439 = vrot.lane.b32.xlu0 %v362, 127
    %v440 = vpop.permute.xlu0 %439
    %441 = vrot.lane.b32.xlu0 %v367, 127
    %v442 = vpop.permute.xlu0 %441
    %443 = vrot.lane.b32.xlu0 %v372, 127
    %v444 = vpop.permute.xlu0 %443
    %445 = vrot.lane.b32.xlu0 %v377, 127
    %v446 = vpop.permute.xlu0 %445
    %447 = vrot.lane.b32.xlu0 %v382, 127
    %v448 = vpop.permute.xlu0 %447
    %449 = vrot.lane.b32.xlu0 %v387, 127
    %v450 = vpop.permute.xlu0 %449
    %451 = vrot.lane.b32.xlu0 %v392, 127
    %v452 = vpop.permute.xlu0 %451
    %453 = vrot.lane.b32.xlu0 %v397, 127
    %v454 = vpop.permute.xlu0 %453
    %v463 = vadd.f32 %v322, %v440
    %v464 = vadd.f32 %v327, %v442
    %v465 = vadd.f32 %v332, %v444
    %v466 = vadd.f32 %v337, %v446
    %v467 = vadd.f32 %v342, %v448
    %v468 = vadd.f32 %v347, %v450
    %v469 = vadd.f32 %v352, %v452
    %v470 = vadd.f32 %v357, %v454
    %v471 = vadd.f32 %v463, %v416
    %v472 = vadd.f32 %v464, %v418
    %v473 = vadd.f32 %v465, %v420
    %v474 = vadd.f32 %v466, %v422
    %v475 = vadd.f32 %v467, %v424
    %v476 = vadd.f32 %v468, %v426
    %v477 = vadd.f32 %v469, %v428
    %v478 = vadd.f32 %v470, %v430
    %v479 = vld [vmem:[#allocation2] sm:$0x1]
    %v481 = vlaneseq
    %v482 = vshrl.u32 %v481, 7
    %v483 = vsub.s32 0, %v482
    %v484 = vrot.slane %v479, %v483
    %485 = vrot.lane.b32.xlu0 %v484, 8
    %v486 = vpop.permute.xlu0 %485
    %v488 = vadd.f32 %v471, %v486
    %v489 = vadd.f32 %v472, %v486
    %v490 = vadd.f32 %v473, %v486
    %v491 = vadd.f32 %v474, %v486
    %v492 = vadd.f32 %v475, %v486
    %v493 = vadd.f32 %v476, %v486
    %v494 = vadd.f32 %v477, %v486
    %v495 = vadd.f32 %v478, %v486
    %vm496 = vcmp.gt.f32.partialorder %v488, 0.0
    %vm497 = vcmp.gt.f32.partialorder %v489, 0.0
    %vm498 = vcmp.gt.f32.partialorder %v490, 0.0
    %vm499 = vcmp.gt.f32.partialorder %v491, 0.0
    %vm500 = vcmp.gt.f32.partialorder %v492, 0.0
    %vm501 = vcmp.gt.f32.partialorder %v493, 0.0
    %vm502 = vcmp.gt.f32.partialorder %v494, 0.0
    %vm503 = vcmp.gt.f32.partialorder %v495, 0.0
    %v504 = vmul.f32 %v488, 0.2
    %v505 = vmul.f32 %v489, 0.2
    %v506 = vmul.f32 %v490, 0.2
    %v507 = vmul.f32 %v491, 0.2
    %v508 = vmul.f32 %v492, 0.2
    %v509 = vmul.f32 %v493, 0.2
    %v510 = vmul.f32 %v494, 0.2
    %v511 = vmul.f32 %v495, 0.2
    %v512 = vsel %vm496, %v488, %v504
    %v513 = vsel %vm497, %v489, %v505
    %v514 = vsel %vm498, %v490, %v506
    %v515 = vsel %vm499, %v491, %v507
    %v516 = vsel %vm500, %v492, %v508
    %v517 = vsel %vm501, %v493, %v509
    %v518 = vsel %vm502, %v494, %v510
    %v519 = vsel %vm503, %v495, %v511
    %vm520 = vcmask 72768
    %v521 = vsel %vm520, %v512, -inf
    %v522 = vsel %vm520, %v513, -inf
    %v523 = vsel %vm520, %v514, -inf
    %v524 = vsel %vm520, %v515, -inf
    %v525 = vmax.f32 %v521, %v522
    %v526 = vmax.f32 %v523, %v524
    %v527 = vmax.f32 %v525, %v526
    %528 = vmax.xlane.f32.xlu0 %v527
    %v529 = vpop.xlane.xlu0 %528
    %v530 = vrot.slane %v529, 4
    %v531 = vmax.f32 %v529, %v530
    %v532 = vrot.slane %v531, 2
    %v533 = vmax.f32 %v531, %v532
    %v534 = vrot.slane %v533, 1
    %v535 = vmax.f32 %v533, %v534
    %s536 = vtos %v535
    %v537 = vstv %s536
    %v538 = vsub.f32 %v512, %v537
    %v539 = vsub.f32 %v513, %v537
    %v540 = vsub.f32 %v514, %v537
    %v541 = vsub.f32 %v515, %v537
    %v542 = vmul.f32 %v538, 1.442695
    %v543 = vpow.pop %v542
    %v544 = vmul.f32 %v539, 1.442695
    %v545 = vpow.pop %v544
    %v546 = vmul.f32 %v540, 1.442695
    %v547 = vpow.pop %v546
    %v548 = vmul.f32 %v541, 1.442695
    %v549 = vpow.pop %v548
    %v550 = vsel %vm520, %v516, -inf
    %v551 = vsel %vm520, %v517, -inf
    %v552 = vsel %vm520, %v518, -inf
    %v553 = vsel %vm520, %v519, -inf
    %v554 = vmax.f32 %v550, %v551
    %v555 = vmax.f32 %v552, %v553
    %v556 = vmax.f32 %v554, %v555
    %557 = vmax.xlane.f32.xlu0 %v556
    %v558 = vpop.xlane.xlu0 %557
    %v559 = vrot.slane %v558, 4
    %v560 = vmax.f32 %v558, %v559
    %v561 = vrot.slane %v560, 2
    %v562 = vmax.f32 %v560, %v561
    %v563 = vrot.slane %v562, 1
    %v564 = vmax.f32 %v562, %v563
    %s565 = vtos %v564
    %v566 = vstv %s565
    %v567 = vsub.f32 %v516, %v566
    %v568 = vsub.f32 %v517, %v566
    %v569 = vsub.f32 %v518, %v566
    %v570 = vsub.f32 %v519, %v566
    %v571 = vmul.f32 %v567, 1.442695
    %v572 = vpow.pop %v571
    %v573 = vmul.f32 %v568, 1.442695
    %v574 = vpow.pop %v573
    %v575 = vmul.f32 %v569, 1.442695
    %v576 = vpow.pop %v575
    %v577 = vmul.f32 %v570, 1.442695
    %v578 = vpow.pop %v577
    %580 = vset.pattern.permute.xlu0 8
    %581 = vperm.xlu0 %580, %v543
    %v582 = vpop.permute.xlu0 %581
    %585 = vset.pattern.permute.xlu0 8
    %586 = vperm.xlu0 %585, %v545
    %v587 = vpop.permute.xlu0 %586
    %590 = vset.pattern.permute.xlu0 8
    %591 = vperm.xlu0 %590, %v547
    %v592 = vpop.permute.xlu0 %591
    %595 = vset.pattern.permute.xlu0 8
    %596 = vperm.xlu0 %595, %v549
    %v597 = vpop.permute.xlu0 %596
    %600 = vset.pattern.permute.xlu0 8
    %601 = vperm.xlu0 %600, %v572
    %v602 = vpop.permute.xlu0 %601
    %605 = vset.pattern.permute.xlu0 8
    %606 = vperm.xlu0 %605, %v574
    %v607 = vpop.permute.xlu0 %606
    %610 = vset.pattern.permute.xlu0 8
    %611 = vperm.xlu0 %610, %v576
    %v612 = vpop.permute.xlu0 %611
    %615 = vset.pattern.permute.xlu0 8
    %616 = vperm.xlu0 %615, %v578
    %v617 = vpop.permute.xlu0 %616
    %v619 = vmul.f32 %v582, %v322
    %v620 = vmul.f32 %v587, %v327
    %v621 = vmul.f32 %v592, %v332
    %v622 = vmul.f32 %v597, %v337
    %v623 = vmul.f32 %v602, %v342
    %v624 = vmul.f32 %v607, %v347
    %v625 = vmul.f32 %v612, %v352
    %v626 = vmul.f32 %v617, %v357
    %vm627 = vcmask 64512
    %v628 = vsel %vm627, %v619, %v543
    %v629 = vsel %vm627, %v620, %v545
    %v630 = vsel %vm627, %v621, %v547
    %v631 = vsel %vm627, %v622, %v549
    %v632 = vsel %vm627, %v623, %v572
    %v633 = vsel %vm627, %v624, %v574
    %v634 = vsel %vm627, %v625, %v576
    %v635 = vsel %vm627, %v626, %v578
    %vm636 = vcmask 523264
    %v638 = vsel %vm636, %v170, 0
    %v641 = vsel %vm636, %v171, 0
    %v644 = vsel %vm636, %v172, 0
    %v647 = vsel %vm636, %v173, 0
    %649 = vmatprep.subr.mxu0 0.0
    %650 = vmatpush1.msra.mxu0 %v628
    %651 = vmatprep.subr.mxu0 0.0
    %652 = vmatpush1.msra.mxu0 %v629
    %653 = vmatprep.subr.mxu0 0.0
    %654 = vmatpush1.msra.mxu0 %v630
    %655 = vmatprep.subr.mxu0 0.0
    %656 = vmatpush1.msra.mxu0 %v631
    %657 = vmatprep.subr.mxu0 0.0
    %658 = vmatpush1.msra.mxu0 %v632
    %659 = vmatprep.subr.mxu0 0.0
    %660 = vmatpush1.msra.mxu0 %v633
    %661 = vmatprep.subr.mxu0 0.0
    %662 = vmatpush1.msra.mxu0 %v634
    %663 = vmatprep.subr.mxu0 0.0
    %664 = vmatpush1.msra.mxu0 %v635
    %665 = vmatprep.subr.mxu0 0.0
    %666 = vmatpush1.msra.mxu0 0.0
    %667 = vmatprep.subr.mxu0 0.0
    %668 = vmatpush1.msra.mxu0 0.0
    %669 = vmatprep.subr.mxu0 0.0
    %670 = vmatpush1.msra.mxu0 0.0
    %671 = vmatprep.subr.mxu0 0.0
    %672 = vmatpush1.msra.mxu0 0.0
    %673 = vmatprep.subr.mxu0 0.0
    %674 = vmatpush1.msra.mxu0 0.0
    %675 = vmatprep.subr.mxu0 0.0
    %676 = vmatpush1.msra.mxu0 0.0
    %677 = vmatprep.subr.mxu0 0.0
    %678 = vmatpush1.msra.mxu0 0.0
    %679 = vmatprep.subr.mxu0 0.0
    %680 = vmatpush1.msra.mxu0 0.0
    %681 = vmatprep.subr.mxu0 0.0
    %682 = vmatpush1.msra.mxu0 0.0
    %683 = vmatprep.subr.mxu0 0.0
    %684 = vmatpush1.msra.mxu0 0.0
    %685 = vmatprep.subr.mxu0 0.0
    %686 = vmatpush1.msra.mxu0 0.0
    %687 = vmatprep.subr.mxu0 0.0
    %688 = vmatpush1.msra.mxu0 0.0
    %689 = vmatprep.subr.mxu0 0.0
    %690 = vmatpush1.msra.mxu0 0.0
    %691 = vmatprep.subr.mxu0 0.0
    %692 = vmatpush1.msra.mxu0 0.0
    %693 = vmatprep.subr.mxu0 0.0
    %694 = vmatpush1.msra.mxu0 0.0
    %695 = vmatprep.subr.mxu0 0.0
    %696 = vmatpush1.msra.mxu0 0.0
    %697 = vmatprep.subr.mxu0 0.0
    %698 = vmatpush1.msra.mxu0 0.0
    %699 = vmatprep.subr.mxu0 0.0
    %700 = vmatpush1.msra.mxu0 0.0
    %701 = vmatprep.subr.mxu0 0.0
    %702 = vmatpush1.msra.mxu0 0.0
    %703 = vmatprep.subr.mxu0 0.0
    %704 = vmatpush1.msra.mxu0 0.0
    %705 = vmatprep.subr.mxu0 0.0
    %706 = vmatpush1.msra.mxu0 0.0
    %707 = vmatprep.subr.mxu0 0.0
    %708 = vmatpush1.msra.mxu0 0.0
    %709 = vmatprep.subr.mxu0 0.0
    %710 = vmatpush1.msra.mxu0 0.0
    %711 = vmatprep.subr.mxu0 0.0
    %712 = vmatpush1.msra.mxu0 0.0
    %713 = vmatprep.mubr.f32.mxu0 0.0
    %714 = vmatmul.mubr.f32.gmra.mrb[0].mxu0 %v638
    %v715 = vpop.f32.mrb[0].mxu0
    %v716 = vadd.f32 0.0, %v715
    %v717 = vpop.f32.mrb[0].mxu0
    %718 = vmatprep.mubr.f32.mxu0 0.0
    %719 = vmatmul.mubr.f32.gmra.mrb[0].mxu0 %v641
    %v720 = vpop.f32.mrb[0].mxu0
    %v721 = vadd.f32 0.0, %v720
    %v722 = vpop.f32.mrb[0].mxu0
    %723 = vmatprep.mubr.f32.mxu0 0.0
    %724 = vmatmul.mubr.f32.gmra.mrb[0].mxu0 %v644
    %v725 = vpop.f32.mrb[0].mxu0
    %v726 = vadd.f32 0.0, %v725
    %v727 = vpop.f32.mrb[0].mxu0
    %728 = vmatprep.mubr.f32.mxu0 0.0
    %729 = vmatmul.mubr.f32.gmra.mrb[0].mxu0 %v647
    %v730 = vpop.f32.mrb[0].mxu0
    %v731 = vadd.f32 0.0, %v730
    %v732 = vpop.f32.mrb[0].mxu0
    %733 = vdwg.mxu0
    %v734 = vadd.f32 %v716, 1e-08
    %v735 = vadd.f32 %v721, 1e-08
    %v736 = vadd.f32 %v726, 1e-08
    %v737 = vadd.f32 %v731, 1e-08
    %v738 = vrcp.pop %v734
    %v739 = vrcp.pop %v735
    %v740 = vrcp.pop %v736
    %v741 = vrcp.pop %v737
    %743 = vset.pattern.permute.xlu0 8
    %744 = vperm.xlu0 %743, %v738
    %v745 = vpop.permute.xlu0 %744
    %748 = vset.pattern.permute.xlu0 8
    %749 = vperm.xlu0 %748, %v739
    %v750 = vpop.permute.xlu0 %749
    %753 = vset.pattern.permute.xlu0 8
    %754 = vperm.xlu0 %753, %v740
    %v755 = vpop.permute.xlu0 %754
    %758 = vset.pattern.permute.xlu0 8
    %759 = vperm.xlu0 %758, %v741
    %v760 = vpop.permute.xlu0 %759
    %v762 = vmul.f32 %v716, %v745
    %v763 = vmul.f32 %v721, %v750
    %v764 = vmul.f32 %v726, %v755
    %v765 = vmul.f32 %v731, %v760
    %v766 = vsel %vm627, %v762, 0.0
    %v767 = vsel %vm627, %v763, 0.0
    %v768 = vsel %vm627, %v764, 0.0
    %v769 = vsel %vm627, %v765, 0.0
    %770 = vst [vmem:[#allocation6] sm:$0xff] %v766
    %771 = vst [vmem:[#allocation6 + $0x8] sm:$0xff] %v767
    %772 = vst [vmem:[#allocation6 + $0x10] sm:$0xff] %v768
    %773 = vst [vmem:[#allocation6 + $0x18] sm:$0xff] %v769
    // Predicated region
    $region30: #{tpu_custom_call.1} parent=1 // pred_check
      _
    $region31: #{tpu_custom_call.1} parent=1 // pred_check_branch
      %775 = sbr.rel (0) target = $region33
    $region32: #{tpu_custom_call.1} parent=1 // pred_region
      %s777 = ssub.s32 512, 512
      %778 = vsyncadd [#allocation5], %s777
      %s779 = sshll.u32 [#allocation6], 4
      %s780 = int_to_ptr.vmem [resolvable:$true] %s779
      %785 = dma.vmem_to_hbm [thread:$0]  %s780, 512, %s6, [#allocation5], 128, 128, 8
    $region33: #{tpu_custom_call.1} parent=1 // pred_fallthru
      _
    // Predicated region
    $region34: #{tpu_custom_call.1} parent=1 // pred_check
      _
    $region35: #{tpu_custom_call.1} parent=1 // pred_check_branch
      %787 = sbr.rel (0) target = $region37
    $region36: #{tpu_custom_call.1} parent=1 // pred_region
      %788 = dma.done [#allocation5], 512
    $region37: #{tpu_custom_call.1} parent=1 // pred_fallthru
      _
    %789 = vsyncpa [#allocation4], 1
    %790 = vsyncpa [#allocation5], 1

</llo_original>
